<compile_context>
chip_gen: v6e
topology: v6e:2x2x1
jax: 0.10.0
libtpu: 0.0.40
codegen_flags: <defaults>
</compile_context>

<pallas_src>
import functools
import math

import jax
import jax.numpy as jnp
from jax.experimental import pallas as pl
from jax.experimental.pallas import tpu as pltpu


# ----------------------------------------------------------------------------------
# pltpu.roll direction probe (one tiny eager kernel, cached)
# ----------------------------------------------------------------------------------

_ROLL_IS_NUMPY = None


def _probe_roll_semantics():
    """True iff pltpu.roll(x, s, axis)[..., i] == x[..., (i - s) % n] (jnp.roll semantics)."""
    global _ROLL_IS_NUMPY
    if _ROLL_IS_NUMPY is None:
        def kern(x_ref, o_ref):
            o_ref[...] = pltpu.roll(x_ref[...], 1, axis=1)

        x = jnp.broadcast_to(jnp.arange(128, dtype=jnp.float32), (8, 128))
        y = pl.pallas_call(
            kern, out_shape=jax.ShapeDtypeStruct((8, 128), jnp.float32))(x)
        # numpy semantics: y[0, 1] == x[0, 0] == 0 ; opposite: y[0, 1] == x[0, 2] == 2
        _ROLL_IS_NUMPY = bool(abs(float(y[0, 1])) < 0.5)
    return _ROLL_IS_NUMPY


def _round_up(n, m):
    return ((n + m - 1) // m) * m


# ----------------------------------------------------------------------------------
# Fused ELSABlock kernel (bt images per grid step, layout (C, bt*H*W))
# ----------------------------------------------------------------------------------

def _elsa_block_kernel(
    x_ref,                                   # (1, C, N)  f32
    mask_ref,                                # (ks2, N)   f32 0/1 zero-padding masks
    wqkv_ref,                                # (2*dqk+dv, C)        bf16 (ln1 scale folded)
    wconv_ref,                               # (ngroups, gw, ks2*gw) bf16 stacked conv W
    wattn2_ref,                              # (G*band, dqk)        bf16
    ghost_ref,                               # (2*dv, ks2)          f32  [ghost_mul; ghost_add]
    wpost_ref,                               # (C, dv)              bf16
    wfc1_ref,                                # (hid, C)             bf16 (ln2 scale folded)
    wfc2_ref,                                # (C, hid)             bf16
    bias_ref,                                # (TOT, 1)             f32 packed biases
    o_ref,                                   # (1, C, N)
    stack_scr,                               # VMEM (ks2*gw, N) f32: stacked conv operand
    a1_scr,                                  # VMEM (dqk, N)    f32: conv output
    out_scr,                                 # VMEM (dv, N)     f32: ELSA output
    *, H, W, ks, G, dqk, dv, gw, scale, eps, band, bias_off, roll_is_numpy,
):
    C = x_ref.shape[1]
    N = x_ref.shape[2]
    ks2 = ks * ks
    pad = ks // 2
    Cg = dv // G
    ngroups = dqk // gw
    f32 = jnp.float32
    bf16 = jnp.bfloat16

    def bias(name):
        s, l = bias_off[name]
        return bias_ref[s:s + l, :]                           # (l, 1)

    x = x_ref[0]                                              # (C, N)

    # channel LayerNorm (unbiased variance, matching torch.var in LayerNorm2d);
    # the affine (w, b) has been folded into the following matmul on the host.
    def ln_normalize(z):
        n = z.shape[0]
        mu = jnp.mean(z, axis=0, keepdims=True)
        d = z - mu
        var = jnp.sum(d * d, axis=0, keepdims=True) * (1.0 / (n - 1))
        return d * jax.lax.rsqrt(var + eps)

    # ---- LN1 + pre_proj (1x1 conv) + hadamard product ----
    xhat = ln_normalize(x)
    qkv = jnp.dot(wqkv_ref[...], xhat.astype(bf16),
                  preferred_element_type=f32) + bias("qkv")   # (2dqk+dv, N)
    had = qkv[0:dqk] * qkv[dqk:2 * dqk] * scale               # (dqk, N)
    v = qkv[2 * dqk:2 * dqk + dv]                             # (dv, N)

    # ---- in-register zero-padded spatial shift on the flattened lane axis ----
    # Works with batch folding: out-of-image (hence cross-image) lanes are masked to 0.
    def shifted(z, kidx, dh, dw):
        if dh == 0 and dw == 0:
            return z
        off = dh * W + dw
        s = ((-off) if roll_is_numpy else off) % N
        return pltpu.roll(z, s, axis=1) * mask_ref[kidx:kidx + 1, :]

    # ---- attn[0]: grouped ks x ks conv as 3 K-stacked matmuls (K = ks2*gw = 200) ----
    for go in range(ngroups):
        hg = had[go * gw:(go + 1) * gw]                       # (gw, N)
        for kh in range(ks):
            for kw in range(ks):
                kidx = kh * ks + kw
                stack_scr[kidx * gw:(kidx + 1) * gw, :] = shifted(hg, kidx, kh - pad, kw - pad)
        a1_scr[go * gw:(go + 1) * gw, :] = jnp.dot(
            wconv_ref[go], stack_scr[...].astype(bf16), preferred_element_type=f32)
    a1 = jax.nn.gelu(a1_scr[...] + bias("conv"), approximate=False)    # (dqk, N)

    # ---- attn[2]: 1x1 conv -> ks^2 * num_heads logits (head bands padded to `band`) ----
    logits = jnp.dot(wattn2_ref[...], a1.astype(bf16),
                     preferred_element_type=f32) + bias("attn2")       # (G*band, N)

    # ---- ghost params loaded once (hoisted out of the reduce loop) ----
    gh = ghost_ref[...]                                       # (2*dv, ks2)
    gm_all = gh[0:dv]
    ga_all = gh[dv:2 * dv]

    # ---- per-head softmax + ELSA unfold-reduce ----
    for g in range(G):
        lg = logits[g * band:g * band + ks2]                  # (ks2, N)
        m = jnp.max(lg, axis=0, keepdims=True)
        e = jnp.exp(lg - m)
        p = e * pl.reciprocal(jnp.sum(e, axis=0, keepdims=True), approx=True)  # (ks2, N)

        vg = v[g * Cg:(g + 1) * Cg]                           # (Cg, N)
        gm_g = gm_all[g * Cg:(g + 1) * Cg]                    # (Cg, ks2)
        ga_g = ga_all[g * Cg:(g + 1) * Cg]

        acc0 = jnp.zeros((Cg, N), f32)                        # 2 independent accumulators
        acc1 = jnp.zeros((Cg, N), f32)
        for kh in range(ks):
            for kw in range(ks):
                kidx = kh * ks + kw
                vs = shifted(vg, kidx, kh - pad, kw - pad)    # (Cg, N)
                filt = gm_g[:, kidx:kidx + 1] * p[kidx:kidx + 1, :] + ga_g[:, kidx:kidx + 1]
                contrib = vs * filt
                if kidx % 2 == 0:
                    acc0 = acc0 + contrib
                else:
                    acc1 = acc1 + contrib
        out_scr[g * Cg:(g + 1) * Cg, :] = acc0 + acc1

    # ---- post_proj (single matmul over all heads) + residual ----
    att = jnp.dot(wpost_ref[...], out_scr[...].astype(bf16),
                  preferred_element_type=f32) + bias("post")
    x2 = x + att                                              # (C, N)

    # ---- MLP branch (LN2 affine folded into fc1) + residual ----
    xhat2 = ln_normalize(x2)
    h = jnp.dot(wfc1_ref[...], xhat2.astype(bf16),
                preferred_element_type=f32) + bias("fc1")
    h = jax.nn.gelu(h, approximate=False)
    h = jnp.dot(wfc2_ref[...], h.astype(bf16),
                preferred_element_type=f32) + bias("fc2")
    o_ref[0] = (x2 + h).astype(o_ref.dtype)


# ----------------------------------------------------------------------------------
# Wrapper: parameter prep (kernel-ready layouts) + pallas_call
# ----------------------------------------------------------------------------------

def _build_shift_masks(H, W, ks):
    """(ks*ks, H*W) float 0/1: which flattened pixels stay in-image after shift (kh,kw)."""
    pad = ks // 2
    idx = jnp.arange(H * W)
    r, c = idx // W, idx % W
    rows = []
    for kh in range(ks):
        for kw in range(ks):
            dh, dw = kh - pad, kw - pad
            ok = (r + dh >= 0) & (r + dh < H) & (c + dw >= 0) & (c + dw < W)
            rows.append(ok)
    return jnp.stack(rows).astype(jnp.float32)


def prepare_kernel_params(p, cfg):
    dqk, dv, G = cfg["dim_qk"], cfg["dim_v"], cfg["num_heads"]
    ks, gw = cfg["ks"], cfg["group_width"]
    ks2 = ks * ks
    band = _round_up(ks2, 8)                       # sublane-aligned per-head band
    ngroups = dqk // gw
    bf16 = jnp.bfloat16

    # LN1 affine folded into pre_proj (scale -> columns, bias -> extra bias column).
    wqkv = (p["pre_w"] * p["norm1_w"][None, :]).astype(bf16)
    bqkv = p["pre_w"] @ p["norm1_b"]

    # grouped conv -> per-group K-stacked weights (ngroups, gw, ks2*gw)
    w4 = p["attn0_w"].reshape(ngroups, gw, gw, ks, ks)         # (go, co_l, ci_l, kh, kw)
    wconv = jnp.transpose(w4, (0, 1, 3, 4, 2)).reshape(ngroups, gw, ks2 * gw).astype(bf16)

    # attn[2] weight/bias: pad each head's ks^2 output rows to an 8-aligned band
    w2, b2 = p["attn2_w"], p["attn2_b"]
    w2p = jnp.zeros((G * band, dqk), jnp.float32)
    b2p = jnp.zeros((G * band,), jnp.float32)
    for g in range(G):
        w2p = w2p.at[g * band:g * band + ks2].set(w2[g * ks2:(g + 1) * ks2])
        b2p = b2p.at[g * band:g * band + ks2].set(b2[g * ks2:(g + 1) * ks2])
    wattn2 = w2p.astype(bf16)

    # ghost_mul / ghost_add packed into one operand (lam = gamma = 1)
    gh = p["ghost_head"]                            # (2, 1, dv, ks, ks)
    ghost = jnp.concatenate(
        [gh[0, 0].reshape(dv, ks2), gh[1, 0].reshape(dv, ks2)], axis=0
    ).astype(jnp.float32)

    wpost = p["post_w"].astype(bf16)

    # LN2 affine folded into fc1
    wfc1 = (p["fc1_w"] * p["norm2_w"][None, :]).astype(bf16)
    bfc1 = p["fc1_w"] @ p["norm2_b"] + p["fc1_b"]
    wfc2 = p["fc2_w"].astype(bf16)

    # pack all per-row biases into one (TOT, 1) operand at 8-aligned static offsets
    segs = [("qkv", bqkv), ("conv", p["attn0_b"]), ("attn2", b2p),
            ("post", p["post_b"]), ("fc1", bfc1), ("fc2", p["fc2_b"])]
    bias_off, cols, off = {}, [], 0
    for name, vec in segs:
        vec = jnp.asarray(vec, jnp.float32).reshape(-1)
        L = int(vec.shape[0])
        Lp = _round_up(L, 8)
        cols.append(jnp.pad(vec, (0, Lp - L)))
        bias_off[name] = (off, L)
        off += Lp
    bias_pack = jnp.concatenate(cols).reshape(-1, 1)

    weights = dict(wqkv=wqkv, wconv=wconv, wattn2=wattn2, ghost=ghost,
                   wpost=wpost, wfc1=wfc1, wfc2=wfc2, bias=bias_pack)
    return weights, band, bias_off


def elsa_block_forward(x, params, cfg, images_per_step=None):
    B, C, H, W = x.shape
    dqk, dv, G, ks = cfg["dim_qk"], cfg["dim_v"], cfg["num_heads"], cfg["ks"]
    gw = cfg["group_width"]
    HW = H * W

    # Fold several images onto the lane axis (kernel is overhead-bound at small dims).
    if images_per_step is None:
        images_per_step = max(1, min(B, 1024 // max(HW, 1)))
    bt = max(1, images_per_step)
    while B % bt != 0:
        bt -= 1
    N = bt * HW
    nsteps = B // bt
    assert N % 128 == 0 and C % 8 == 0 and dqk % gw == 0 and dv % G == 0 and (dv // G) % 8 == 0

    weights, band, bias_off = prepare_kernel_params(params, cfg)
    masks = jnp.tile(_build_shift_masks(H, W, ks), (1, bt))   # (ks2, N)

    kern = functools.partial(
        _elsa_block_kernel, H=H, W=W, ks=ks, G=G, dqk=dqk, dv=dv, gw=gw,
        scale=float(cfg["scale"]), eps=1e-5, band=band, bias_off=bias_off,
        roll_is_numpy=_probe_roll_semantics(),
    )

    def full_spec(a):
        zeros = (0,) * a.ndim
        return pl.BlockSpec(a.shape, lambda s: zeros)

    names = ("wqkv", "wconv", "wattn2", "ghost", "wpost", "wfc1", "wfc2", "bias")
    operands = [masks] + [weights[n] for n in names]

    # (B, C, H, W) -> (nsteps, C, bt*HW): channels on sublanes, images concatenated on lanes
    xr = x.reshape(nsteps, bt, C, HW).transpose(0, 2, 1, 3).reshape(nsteps, C, N)

    out = pl.pallas_call(
        kern,
        out_shape=jax.ShapeDtypeStruct((nsteps, C, N), x.dtype),
        grid=(nsteps,),
        in_specs=[pl.BlockSpec((1, C, N), lambda s: (s, 0, 0))]
                 + [full_spec(a) for a in operands],
        out_specs=pl.BlockSpec((1, C, N), lambda s: (s, 0, 0)),
        scratch_shapes=[
            pltpu.VMEM((ks * ks * gw, N), jnp.float32),   # K-stacked conv operand
            pltpu.VMEM((dqk, N), jnp.float32),            # conv output (pre-GELU)
            pltpu.VMEM((dv, N), jnp.float32),             # ELSA output (all heads)
        ],
        compiler_params=pltpu.CompilerParams(
            dimension_semantics=("parallel",),
            vmem_limit_bytes=32 * 1024 * 1024,
        ),
    )(xr, *operands)

    return out.reshape(nsteps, C, bt, HW).transpose(0, 2, 1, 3).reshape(B, C, H, W)


# ----------------------------------------------------------------------------------
# Pure-JAX reference (mirrors the PyTorch module) + parameter init
# ----------------------------------------------------------------------------------

def _im2col(z, ks, pad):
    N, C, H, W = z.shape
    zp = jnp.pad(z, ((0, 0), (0, 0), (pad, pad), (pad, pad)))
    cols = [zp[:, :, kh:kh + H, kw:kw + W] for kh in range(ks) for kw in range(ks)]
    return jnp.stack(cols, axis=2)                 # (N, C, ks*ks, H, W)


def elsa_block_reference(x, p, cfg):
    B, C, H, W = x.shape
    dqk, dv, G, ks = cfg["dim_qk"], cfg["dim_v"], cfg["num_heads"], cfg["ks"]
    gw, scale = cfg["group_width"], cfg["scale"]
    pad = ks // 2
    eps = 1e-5
    Cg = dv // G

    def ln2d(z, w, b):
        mu = jnp.mean(z, axis=1, keepdims=True)
        var = jnp.var(z, axis=1, keepdims=True, ddof=1)   # torch.var (unbiased), as in LayerNorm2d
        return (z - mu) * w.reshape(1, -1, 1, 1) / jnp.sqrt(var + eps) + b.reshape(1, -1, 1, 1)

    def conv1x1(z, w, b=None):
        y = jnp.einsum("oc,bchw->bohw", w, z)
        return y if b is None else y + b.reshape(1, -1, 1, 1)

    xn = ln2d(x, p["norm1_w"], p["norm1_b"])
    qkv = conv1x1(xn, p["pre_w"])
    q, k, v = qkv[:, :dqk], qkv[:, dqk:2 * dqk], qkv[:, 2 * dqk:]
    had = q * k * scale
    a1 = jax.lax.conv_general_dilated(
        had, p["attn0_w"], window_strides=(1, 1), padding=((pad, pad), (pad, pad)),
        feature_group_count=dqk // gw, dimension_numbers=("NCHW", "OIHW", "NCHW"))
    a1 = jax.nn.gelu(a1 + p["attn0_b"].reshape(1, -1, 1, 1), approximate=False)
    h_attn = conv1x1(a1, p["attn2_w"], p["attn2_b"]).reshape(B * G, ks * ks, H, W)
    h_attn = jax.nn.softmax(h_attn, axis=1).reshape(B * G, 1, ks * ks, H * W)
    vv = v.reshape(B * G, Cg, H, W)
    feats = _im2col(vv, ks, pad).reshape(B * G, Cg, ks * ks, H * W)
    gm = jnp.broadcast_to(p["ghost_head"][0], (B, dv, ks, ks)).reshape(B * G, Cg, ks * ks, 1)
    ga = jnp.broadcast_to(p["ghost_head"][1], (B, dv, ks, ks)).reshape(B * G, Cg, ks * ks, 1)
    out = (feats * (gm * h_attn + ga)).sum(2).reshape(B, dv, H, W)
    x = x + conv1x1(out, p["post_w"], p["post_b"])
    xn2 = ln2d(x, p["norm2_w"], p["norm2_b"])
    h = jax.nn.gelu(conv1x1(xn2, p["fc1_w"], p["fc1_b"]), approximate=False)
    h = conv1x1(h, p["fc2_w"], p["fc2_b"])
    return x + h


def init_params(key, cfg):
    dim, dqk, dv, G, ks = cfg["dim"], cfg["dim_qk"], cfg["dim_v"], cfg["num_heads"], cfg["ks"]
    gw, hidden = cfg["group_width"], cfg["mlp_hidden"]
    keys = jax.random.split(key, 12)
    n = lambda k, shape, s=0.1: jax.random.normal(k, shape, jnp.float32) * s
    return {
        "norm1_w": jnp.ones((dim,), jnp.float32),
        "norm1_b": jnp.zeros((dim,), jnp.float32),
        "norm2_w": jnp.ones((dim,), jnp.float32),
        "norm2_b": jnp.zeros((dim,), jnp.float32),
        "pre_w": n(keys[0], (2 * dqk + dv, dim)),               # 1x1 conv, no bias
        "attn0_w": n(keys[1], (dqk, gw, ks, ks)),               # grouped ks x ks conv
        "attn0_b": n(keys[2], (dqk,)),
        "attn2_w": n(keys[3], (ks * ks * G, dqk)),
        "attn2_b": n(keys[4], (ks * ks * G,)),
        # ghost_head: [0] = ghost_mul ~ randn, [1] = ghost_add ~ trunc_normal(std=0.02)
        "ghost_head": jnp.concatenate(
            [jax.random.normal(keys[5], (1, 1, dv, ks, ks), jnp.float32),
             jax.random.normal(keys[6], (1, 1, dv, ks, ks), jnp.float32) * 0.02], axis=0),
        "post_w": n(keys[7], (dim, dv)),
        "post_b": n(keys[8], (dim,)),
        "fc1_w": n(keys[9], (hidden, dim)),
        "fc1_b": jnp.zeros((hidden,), jnp.float32),
        "fc2_w": n(keys[10], (dim, hidden)),
        "fc2_b": jnp.zeros((dim,), jnp.float32),
    }


# ----------------------------------------------------------------------------------
# Main
# ----------------------------------------------------------------------------------

if __name__ == "__main__":
    # ELSABlock(dim=32, kernel_size=5, num_heads=2, qk_scale=1, lam=1, gamma=1, mlp_ratio=3)
    B, dim, H, W = 2, 32, 16, 16
    ks, num_heads, group_width, mlp_ratio = 5, 2, 8, 3.0
    dim_qk = dim // 3 * 2
    if dim_qk % group_width != 0:
        dim_qk = math.ceil(float(dim_qk) / group_width) * group_width      # -> 24
    cfg = {
        "dim": dim, "dim_qk": int(dim_qk), "dim_v": dim, "num_heads": num_heads,
        "ks": ks, "group_width": group_width, "scale": 1.0,                # qk_scale = 1
        "mlp_hidden": int(dim * mlp_ratio),
    }

    key = jax.random.PRNGKey(0)
    kx, kparam = jax.random.split(key)
    x = jax.random.normal(kx, (B, dim, H, W), jnp.float32)
    params = init_params(kparam, cfg)

    _probe_roll_semantics()                     # resolve pltpu.roll direction once, eagerly

    fwd = jax.jit(lambda xx: elsa_block_forward(xx, params, cfg))
    y = fwd(x)
    jax.block_until_ready(y)

    y_ref = jax.jit(lambda xx: elsa_block_reference(xx, params, cfg))(x)
    err = float(jnp.max(jnp.abs(y - y_ref)))

    assert y.shape == (B, dim, H, W), y.shape
    assert bool(jnp.all(jnp.isfinite(y)))
    assert err < 5e-2, f"kernel/reference mismatch: max abs err = {err}"
    print("KERNEL_OK")
</pallas_src>

<mosaic_0001>
module attributes {stable_mosaic.version = 11 : i64} {
  func.func @kern(%arg0: memref<8x128xf32, #tpu.memory_space<vmem>>, %arg1: memref<8x128xf32, #tpu.memory_space<vmem>>) attributes {dimension_semantics = [], scalar_prefetch = 0 : i64, scratch_operands = 0 : i64, tpu.core_type = #tpu.core_type<tc>} {
    %c0 = arith.constant 0 : index
    %c0_0 = arith.constant 0 : index
    %0 = vector.load %arg0[%c0, %c0_0] : memref<8x128xf32, #tpu.memory_space<vmem>>, vector<8x128xf32>
    %c1_i32 = arith.constant 1 : i32
    %1 = tpu.dynamic_rotate %0 by %c1_i32 dim 1 : vector<8x128xf32>, i32 -> vector<8x128xf32>
    %c0_1 = arith.constant 0 : index
    %c0_2 = arith.constant 0 : index
    %2 = vector.load %arg1[%c0_1, %c0_2] : memref<8x128xf32, #tpu.memory_space<vmem>>, vector<8x128xf32>
    tpu.vector_store %arg1[%c0_1, %c0_2], %1 {strides = array<i32>} : memref<8x128xf32, #tpu.memory_space<vmem>>, vector<8x128xf32>,
    return
  }
}

</mosaic_0001>

<llo_original>
// kernel: tpu_custom_call.1
$region0: #{tpu_custom_call.1}
  #allocation0 [shape = 'u32[]', space=smem, size = 0x4, offset = 0x4, fixed_abs, tag = 'smem constant byte address 0x4 - core index']
  #allocation1 [shape = 'u32[144,128]{1,0:T(1,128)}', space=vmem, size = 0x12000, scoped, tag = 'internal scratch']
  %s0 = inlined_call_operand.hbm [shape: f32[8,128], index: 0, kind: input, shape index: {}]
  %s1 = inlined_call_operand.hbm [shape: f32[8,128], index: 1, kind: output, shape index: {}]
  %s2 = sld [smem:[#allocation0]]
  $region18: #{tpu_custom_call.1} parent=0
    _
  %s4 = ssub.s32 1, %s2
  %s5 = scalar_select 0, %s4, %s2
  $region1: #{tpu_custom_call.1} parent=0
    #allocation2 [shape = 'u8[4096]{0}', space=vmem, size = 0x1000, scoped, tag = 'input window, operand 0, single buffered']
    #allocation3 [shape = 's32[1]{0}', space=sflag, size = 0x4, scoped, tag = 'scoped memory for tpu_custom_call.1']
    #allocation4 [shape = 's32[1]{0}', space=sflag, size = 0x4, scoped, tag = 'scoped memory for tpu_custom_call.1']
    #allocation5 [shape = 'u8[4096]{0}', space=vmem, size = 0x1000, scoped, tag = 'output window, operand 0, single buffered']
    %6 = vsyncpa [#allocation3], 0
    %7 = vsyncpa [#allocation4], 0
    // Predicated region
    $region2: #{tpu_custom_call.1} parent=1 // pred_check
      _
    $region3: #{tpu_custom_call.1} parent=1 // pred_check_branch
      %9 = sbr.rel (0) target = $region5
    $region4: #{tpu_custom_call.1} parent=1 // pred_region
      %s11 = ssub.s32 128, 128
      %12 = vsyncadd [#allocation3], %s11
      %s14 = sshll.u32 [#allocation2], 4
      %s15 = int_to_ptr.vmem [resolvable:$true] %s14
      %17 = dma.hbm_to_vmem [thread:$0]  %s0, 128, %s15, [#allocation3]
    $region5: #{tpu_custom_call.1} parent=1 // pred_fallthru
      _
    // Predicated region
    $region6: #{tpu_custom_call.1} parent=1 // pred_check
      _
    $region7: #{tpu_custom_call.1} parent=1 // pred_check_branch
      %19 = sbr.rel (0) target = $region9
    $region8: #{tpu_custom_call.1} parent=1 // pred_region
      %20 = dma.done [#allocation3], 128
    $region9: #{tpu_custom_call.1} parent=1 // pred_fallthru
      _
    %v21 = vld [vmem:[#allocation2] sm:$0xff]
    %22 = vrot.lane.b32.xlu0 %v21, 1
    %v23 = vpop.permute.xlu0 %22
    %24 = vst [vmem:[#allocation5] sm:$0xff] %v23
    // Predicated region
    $region10: #{tpu_custom_call.1} parent=1 // pred_check
      _
    $region11: #{tpu_custom_call.1} parent=1 // pred_check_branch
      %26 = sbr.rel (0) target = $region13
    $region12: #{tpu_custom_call.1} parent=1 // pred_region
      %s28 = ssub.s32 128, 128
      %29 = vsyncadd [#allocation4], %s28
      %s31 = sshll.u32 [#allocation5], 4
      %s32 = int_to_ptr.vmem [resolvable:$true] %s31
      %34 = dma.vmem_to_hbm [thread:$0]  %s32, 128, %s1, [#allocation4]
    $region13: #{tpu_custom_call.1} parent=1 // pred_fallthru
      _
    // Predicated region
    $region14: #{tpu_custom_call.1} parent=1 // pred_check
      _
    $region15: #{tpu_custom_call.1} parent=1 // pred_check_branch
      %36 = sbr.rel (0) target = $region17
    $region16: #{tpu_custom_call.1} parent=1 // pred_region
      %37 = dma.done [#allocation4], 128
    $region17: #{tpu_custom_call.1} parent=1 // pred_fallthru
      _
    %38 = vsyncpa [#allocation3], 1
    %39 = vsyncpa [#allocation4], 1

</llo_original>
